<compile_context>
chip_gen: v5e
topology: v5e:2x2
jax: 0.10.0
libtpu: 0.0.40
codegen_flags: <defaults>
</compile_context>

<pallas_src>
import functools

import jax
import jax.numpy as jnp
from jax.experimental import pallas as pl
from jax.experimental.pallas import tpu as pltpu


# ---------------------------------------------------------------------------
# Pass 1: Gram/row-sum accumulation + SE branch + fold of conv4->BN->conv5.
# ---------------------------------------------------------------------------
def _stats_fold_kernel(x7_ref, w2_ref, b2_ref, w3_ref, b3_ref, w4_ref,
                       gamma_ref, beta_ref, w5_ref, x6_ref,
                       wc_ref, bias_ref, g_acc, m_acc, *, s_true):
    j = pl.program_id(0)

    @pl.when(j == 0)
    def _():
        g_acc[...] = jnp.zeros_like(g_acc)
        m_acc[...] = jnp.zeros_like(m_acc)

    xb = x6_ref[...]                                           # [16, S_BLK], zero-padded
    # Gram update contracting on the spatial axis of both operands (no transpose).
    g_acc[...] += jax.lax.dot_general(
        xb, xb, (((1,), (1,)), ((), ())), preferred_element_type=jnp.float32)
    m_acc[...] += jnp.sum(xb, axis=1, keepdims=True)           # [16, 1]

    @pl.when(j == pl.num_programs(0) - 1)
    def _():
        # --- SE branch on the pooled vector x7 (runs exactly once) ---
        x7 = x7_ref[...]                                                       # [1, 16]
        s1 = jnp.dot(x7, w2_ref[...], preferred_element_type=jnp.float32) + b2_ref[...]
        s1 = jnp.maximum(s1, 0.0)                                              # [1, 8]
        s2 = jnp.dot(s1, w3_ref[...], preferred_element_type=jnp.float32) + b3_ref[...]
        s2 = jnp.clip(s2 + 3.0, 0.0, 6.0) * (1.0 / 6.0)                        # [1, 16]

        # Fold per-channel SE scale into conv2d4 weight (valid because N == 1).
        w4s = w4_ref[...] * s2                                                 # [16, 16]

        # BatchNorm batch stats of x13 = w4s @ x6, from G and m.
        inv_s = 1.0 / s_true
        mean = jnp.dot(w4s, m_acc[...],
                       preferred_element_type=jnp.float32) * inv_s             # [16, 1]
        gw = jnp.dot(w4s, g_acc[...], preferred_element_type=jnp.float32)      # [16, 16]
        ex2 = jnp.sum(gw * w4s, axis=1, keepdims=True) * inv_s                 # [16, 1]
        var = jnp.maximum(ex2 - mean * mean, 0.0)                              # clamp >= 0
        scale = gamma_ref[...] * jax.lax.rsqrt(var + 1e-3)                     # [16, 1]
        shift = beta_ref[...] - mean * scale                                   # [16, 1]

        # Combined conv2d4 -> BN -> conv2d5 weight and bias.
        wc_ref[...] = jnp.dot(w5_ref[...], scale * w4s,
                              preferred_element_type=jnp.float32)              # [72, 16]
        bias_ref[...] = jnp.dot(w5_ref[...], shift,
                                preferred_element_type=jnp.float32)            # [72, 1]


# ---------------------------------------------------------------------------
# Pass 2: apply the folded weight — out = Wc @ x6 + bias, tiled over S.
# ---------------------------------------------------------------------------
def _apply_kernel(wc_ref, bias_ref, x6_ref, out_ref):
    out_ref[...] = (jnp.dot(wc_ref[...], x6_ref[...],
                            preferred_element_type=jnp.float32)
                    + bias_ref[...]).astype(out_ref.dtype)


def _const_spec(shape):
    return pl.BlockSpec(shape, lambda j, _n=len(shape): (0,) * _n)


def _choose_s_block(s_pad, max_blk=2048):
    """Largest multiple of 128 that divides s_pad and is <= max_blk."""
    units = s_pad // 128
    max_units = max(1, max_blk // 128)
    best = 1
    for d in range(1, min(units, max_units) + 1):
        if units % d == 0:
            best = d
    return best * 128


def run_module(x7_nchw, x6_nchw, params):
    N, C, H, W = x6_nchw.shape
    assert N == 1 and C == 16 and x7_nchw.shape == (N, 16, 1, 1)
    S = H * W
    S_pad = ((S + 127) // 128) * 128
    S_BLK = _choose_s_block(S_pad)
    nb = S_pad // S_BLK

    x6 = x6_nchw.reshape(C, S)                     # free reshape (N == 1): [16, S]
    if S_pad != S:
        x6 = jnp.pad(x6, ((0, 0), (0, S_pad - S)))  # zero pad -> lane-dense blocks
    x7 = x7_nchw.reshape(1, C)                     # [1, 16]

    w2, b2, w3, b3, w4, gamma, beta, w5 = params

    # ---- pass 1: stats + fold -> Wc [72,16], bias [72,1] ----
    small_args = (x7, w2, b2, w3, b3, w4, gamma, beta, w5)
    wc, bias = pl.pallas_call(
        functools.partial(_stats_fold_kernel, s_true=float(S)),
        out_shape=(jax.ShapeDtypeStruct((72, 16), jnp.float32),
                   jax.ShapeDtypeStruct((72, 1), jnp.float32)),
        grid=(nb,),
        in_specs=[_const_spec(a.shape) for a in small_args]
                 + [pl.BlockSpec((C, S_BLK), lambda j: (0, j))],
        out_specs=(_const_spec((72, 16)), _const_spec((72, 1))),
        scratch_shapes=[pltpu.VMEM((C, C), jnp.float32),
                        pltpu.VMEM((C, 1), jnp.float32)],
        compiler_params=pltpu.CompilerParams(
            dimension_semantics=("arbitrary",)),
    )(*small_args, x6)

    # ---- pass 2: out = Wc @ x6 + bias, parallel over S blocks ----
    out = pl.pallas_call(
        _apply_kernel,
        out_shape=jax.ShapeDtypeStruct((72, S), jnp.float32),
        grid=(nb,),
        in_specs=[_const_spec((72, 16)),
                  _const_spec((72, 1)),
                  pl.BlockSpec((C, S_BLK), lambda j: (0, j))],
        out_specs=pl.BlockSpec((72, S_BLK), lambda j: (0, j)),
        compiler_params=pltpu.CompilerParams(
            dimension_semantics=("parallel",)),
    )(wc, bias, x6)

    return out.reshape(N, 72, H, W)                # free reshape back to NCHW


def reference(x7_nchw, x6_nchw, params):
    """Pure-JAX reference mirroring the PyTorch forward (training-mode BN)."""
    with jax.default_matmul_precision("highest"):
        w2, b2, w3, b3, w4, gamma, beta, w5 = params
        N, C, H, W = x6_nchw.shape
        x7 = x7_nchw.reshape(N, C)
        s1 = jnp.maximum(x7 @ w2 + b2, 0.0)                           # [N, 8]
        s2 = jnp.clip(s1 @ w3 + b3 + 3.0, 0.0, 6.0) / 6.0             # [N, 16]
        x6 = x6_nchw.reshape(N, C, H * W)                             # [N, 16, S]
        x12 = x6 * s2[:, :, None]
        x13 = jnp.einsum('oc,ncs->nos', w4, x12)                      # [N, 16, S]
        mean = jnp.mean(x13, axis=(0, 2), keepdims=True)
        var = jnp.mean((x13 - mean) ** 2, axis=(0, 2), keepdims=True)
        x14 = ((x13 - mean) * jax.lax.rsqrt(var + 1e-3)
               * gamma.reshape(1, C, 1) + beta.reshape(1, C, 1))
        x15 = jnp.einsum('oc,ncs->nos', w5, x14)                      # [N, 72, S]
        return x15.reshape(N, 72, H, W)


def make_params(key):
    ks = jax.random.split(key, 8)
    # SE-branch weights stored as [Cin, Cout]; main-path weights as [Cout, Cin].
    w2 = 0.1 * jax.random.normal(ks[0], (16, 8), jnp.float32)     # conv2d2
    b2 = 0.1 * jax.random.normal(ks[1], (1, 8), jnp.float32)
    w3 = 0.1 * jax.random.normal(ks[2], (8, 16), jnp.float32)     # conv2d3
    b3 = 0.1 * jax.random.normal(ks[3], (1, 16), jnp.float32)
    w4 = 0.1 * jax.random.normal(ks[4], (16, 16), jnp.float32)    # conv2d4
    gamma = 1.0 + 0.1 * jax.random.normal(ks[5], (16, 1), jnp.float32)  # BN affine
    beta = 0.1 * jax.random.normal(ks[6], (16, 1), jnp.float32)
    w5 = 0.1 * jax.random.normal(ks[7], (16, 72), jnp.float32).T  # conv2d5 [72,16]
    return (w2, b2, w3, b3, w4, gamma, beta, w5)


if __name__ == "__main__":
    key = jax.random.PRNGKey(0)
    k1, k2, kp = jax.random.split(key, 3)

    # Module's actual (small) shapes: N=1, C=16, 56x56 spatial -> S=3136.
    x6 = jax.random.normal(k1, (1, 16, 56, 56), jnp.float32)   # full feature map (NCHW)
    x7 = jax.random.normal(k2, (1, 16, 1, 1), jnp.float32)     # pooled vector  (NCHW)
    params = make_params(kp)

    out = run_module(x7, x6, params)
    out = jax.block_until_ready(out)

    ref = reference(x7, x6, params)
    assert out.shape == (1, 72, 56, 56), out.shape
    assert jnp.allclose(out, ref, atol=2e-4, rtol=2e-4), "mismatch vs reference"

    # TODO(synk): BatchNorm2d running_mean/running_var momentum updates are a
    # training-time side effect that does not affect the returned tensor; not emitted.

    print("KERNEL_OK")
</pallas_src>

<mosaic_0001>
module attributes {stable_mosaic.version = 11 : i64} {
  func.func @_stats_fold_kernel(%arg0: i32, %arg1: memref<1x16xf32, #tpu.memory_space<vmem>>, %arg2: memref<16x8xf32, #tpu.memory_space<vmem>>, %arg3: memref<1x8xf32, #tpu.memory_space<vmem>>, %arg4: memref<8x16xf32, #tpu.memory_space<vmem>>, %arg5: memref<1x16xf32, #tpu.memory_space<vmem>>, %arg6: memref<16x16xf32, #tpu.memory_space<vmem>>, %arg7: memref<16x1xf32, #tpu.memory_space<vmem>>, %arg8: memref<16x1xf32, #tpu.memory_space<vmem>>, %arg9: memref<72x16xf32, #tpu.memory_space<vmem>>, %arg10: memref<16x640xf32, #tpu.memory_space<vmem>>, %arg11: memref<72x16xf32, #tpu.memory_space<vmem>>, %arg12: memref<72x1xf32, #tpu.memory_space<vmem>>, %arg13: memref<16x16xf32, #tpu.memory_space<vmem>>, %arg14: memref<16x1xf32, #tpu.memory_space<vmem>>) attributes {dimension_semantics = [#tpu.dimension_semantics<arbitrary>], iteration_bounds = array<i64: 5>, scalar_prefetch = 0 : i64, scratch_operands = 2 : i64, tpu.core_type = #tpu.core_type<tc>, window_params = [{pipeline_mode = #tpu.pipeline_mode<synchronous>, transform_indices = @transform_0, window_bounds = array<i64: 1, 16>}, {pipeline_mode = #tpu.pipeline_mode<synchronous>, transform_indices = @transform_1, window_bounds = array<i64: 16, 8>}, {pipeline_mode = #tpu.pipeline_mode<synchronous>, transform_indices = @transform_2, window_bounds = array<i64: 1, 8>}, {pipeline_mode = #tpu.pipeline_mode<synchronous>, transform_indices = @transform_3, window_bounds = array<i64: 8, 16>}, {pipeline_mode = #tpu.pipeline_mode<synchronous>, transform_indices = @transform_4, window_bounds = array<i64: 1, 16>}, {pipeline_mode = #tpu.pipeline_mode<synchronous>, transform_indices = @transform_5, window_bounds = array<i64: 16, 16>}, {pipeline_mode = #tpu.pipeline_mode<synchronous>, transform_indices = @transform_6, window_bounds = array<i64: 16, 1>}, {pipeline_mode = #tpu.pipeline_mode<synchronous>, transform_indices = @transform_7, window_bounds = array<i64: 16, 1>}, {pipeline_mode = #tpu.pipeline_mode<synchronous>, transform_indices = @transform_8, window_bounds = array<i64: 72, 16>}, {transform_indices = @transform_9, window_bounds = array<i64: 16, 640>}, {pipeline_mode = #tpu.pipeline_mode<synchronous>, transform_indices = @transform_10, window_bounds = array<i64: 72, 16>}, {pipeline_mode = #tpu.pipeline_mode<synchronous>, transform_indices = @transform_11, window_bounds = array<i64: 72, 1>}]} {
    %c0_i32 = arith.constant 0 : i32
    %0 = arith.cmpi eq, %arg0, %c0_i32 : i32
    %1 = arith.extui %0 : i1 to i32
    %c0_i32_0 = arith.constant 0 : i32
    %2 = arith.cmpi ne, %1, %c0_i32_0 : i32
    scf.if %2 {
      %cst_12 = arith.constant 0.000000e+00 : f32
      %16 = vector.broadcast %cst_12 : f32 to vector<16x16xf32>
      %c0_13 = arith.constant 0 : index
      %c0_14 = arith.constant 0 : index
      %17 = vector.load %arg13[%c0_13, %c0_14] : memref<16x16xf32, #tpu.memory_space<vmem>>, vector<16x16xf32>
      tpu.vector_store %arg13[%c0_13, %c0_14], %16 {strides = array<i32>} : memref<16x16xf32, #tpu.memory_space<vmem>>, vector<16x16xf32>,
      %cst_15 = arith.constant 0.000000e+00 : f32
      %18 = vector.broadcast %cst_15 : f32 to vector<16x1xf32>
      %c0_16 = arith.constant 0 : index
      %c0_17 = arith.constant 0 : index
      %19 = vector.load %arg14[%c0_16, %c0_17] : memref<16x1xf32, #tpu.memory_space<vmem>>, vector<16x1xf32>
      tpu.vector_store %arg14[%c0_16, %c0_17], %18 {strides = array<i32>} : memref<16x1xf32, #tpu.memory_space<vmem>>, vector<16x1xf32>,
    } else {
    }
    %c0 = arith.constant 0 : index
    %c0_1 = arith.constant 0 : index
    %3 = vector.load %arg10[%c0, %c0_1] : memref<16x640xf32, #tpu.memory_space<vmem>>, vector<16x640xf32>
    %c0_2 = arith.constant 0 : index
    %c0_3 = arith.constant 0 : index
    %4 = vector.load %arg13[%c0_2, %c0_3] : memref<16x16xf32, #tpu.memory_space<vmem>>, vector<16x16xf32>
    %cst = arith.constant dense<0.000000e+00> : vector<16x16xf32>
    %5 = tpu.matmul %3, %3, %cst {dimension_numbers = #tpu.dot_dimension_numbers<[1], [1], [0], [0], [0, 0, 1, 0], [], []>} : vector<16x640xf32>, vector<16x640xf32>, vector<16x16xf32> -> vector<16x16xf32>
    %6 = arith.addf %4, %5 : vector<16x16xf32>
    %c0_4 = arith.constant 0 : index
    %c0_5 = arith.constant 0 : index
    %7 = vector.load %arg13[%c0_4, %c0_5] : memref<16x16xf32, #tpu.memory_space<vmem>>, vector<16x16xf32>
    tpu.vector_store %arg13[%c0_4, %c0_5], %6 {strides = array<i32>} : memref<16x16xf32, #tpu.memory_space<vmem>>, vector<16x16xf32>,
    %c0_6 = arith.constant 0 : index
    %c0_7 = arith.constant 0 : index
    %8 = vector.load %arg14[%c0_6, %c0_7] : memref<16x1xf32, #tpu.memory_space<vmem>>, vector<16x1xf32>
    %cst_8 = arith.constant dense<0.000000e+00> : vector<16xf32>
    %9 = vector.multi_reduction <add>, %3, %cst_8 [1] : vector<16x640xf32> to vector<16xf32>
    %10 = vector.shape_cast %9 : vector<16xf32> to vector<16x1xf32>
    %11 = arith.addf %8, %10 : vector<16x1xf32>
    %c0_9 = arith.constant 0 : index
    %c0_10 = arith.constant 0 : index
    %12 = vector.load %arg14[%c0_9, %c0_10] : memref<16x1xf32, #tpu.memory_space<vmem>>, vector<16x1xf32>
    tpu.vector_store %arg14[%c0_9, %c0_10], %11 {strides = array<i32>} : memref<16x1xf32, #tpu.memory_space<vmem>>, vector<16x1xf32>,
    %c4_i32 = arith.constant 4 : i32
    %13 = arith.cmpi eq, %arg0, %c4_i32 : i32
    %14 = arith.extui %13 : i1 to i32
    %c0_i32_11 = arith.constant 0 : i32
    %15 = arith.cmpi ne, %14, %c0_i32_11 : i32
    scf.if %15 {
      %c0_12 = arith.constant 0 : index
      %c0_13 = arith.constant 0 : index
      %16 = vector.load %arg1[%c0_12, %c0_13] : memref<1x16xf32, #tpu.memory_space<vmem>>, vector<1x16xf32>
      %c0_14 = arith.constant 0 : index
      %c0_15 = arith.constant 0 : index
      %17 = vector.load %arg2[%c0_14, %c0_15] : memref<16x8xf32, #tpu.memory_space<vmem>>, vector<16x8xf32>
      %cst_16 = arith.constant dense<0.000000e+00> : vector<1x8xf32>
      %18 = tpu.matmul %16, %17, %cst_16 {dimension_numbers = #tpu.dot_dimension_numbers<[1], [0], [0], [1], [0, 0, 1, 1], [], []>} : vector<1x16xf32>, vector<16x8xf32>, vector<1x8xf32> -> vector<1x8xf32>
      %c0_17 = arith.constant 0 : index
      %c0_18 = arith.constant 0 : index
      %19 = vector.load %arg3[%c0_17, %c0_18] : memref<1x8xf32, #tpu.memory_space<vmem>>, vector<1x8xf32>
      %20 = arith.addf %18, %19 : vector<1x8xf32>
      %cst_19 = arith.constant 0.000000e+00 : f32
      %21 = vector.broadcast %cst_19 : f32 to vector<1x8xf32>
      %22 = arith.maximumf %20, %21 : vector<1x8xf32>
      %c0_20 = arith.constant 0 : index
      %c0_21 = arith.constant 0 : index
      %23 = vector.load %arg4[%c0_20, %c0_21] : memref<8x16xf32, #tpu.memory_space<vmem>>, vector<8x16xf32>
      %cst_22 = arith.constant dense<0.000000e+00> : vector<1x16xf32>
      %24 = tpu.matmul %22, %23, %cst_22 {dimension_numbers = #tpu.dot_dimension_numbers<[1], [0], [0], [1], [0, 0, 1, 1], [], []>} : vector<1x8xf32>, vector<8x16xf32>, vector<1x16xf32> -> vector<1x16xf32>
      %c0_23 = arith.constant 0 : index
      %c0_24 = arith.constant 0 : index
      %25 = vector.load %arg5[%c0_23, %c0_24] : memref<1x16xf32, #tpu.memory_space<vmem>>, vector<1x16xf32>
      %26 = arith.addf %24, %25 : vector<1x16xf32>
      %cst_25 = arith.constant 3.000000e+00 : f32
      %27 = vector.broadcast %cst_25 : f32 to vector<1x16xf32>
      %28 = arith.addf %26, %27 : vector<1x16xf32>
      %cst_26 = arith.constant 0.000000e+00 : f32
      %cst_27 = arith.constant 6.000000e+00 : f32
      %29 = vector.broadcast %cst_26 : f32 to vector<1x16xf32>
      %30 = arith.maximumf %29, %28 : vector<1x16xf32>
      %31 = vector.broadcast %cst_27 : f32 to vector<1x16xf32>
      %32 = arith.minimumf %31, %30 : vector<1x16xf32>
      %cst_28 = arith.constant 0.166666672 : f32
      %33 = vector.broadcast %cst_28 : f32 to vector<1x16xf32>
      %34 = arith.mulf %32, %33 : vector<1x16xf32>
      %c0_29 = arith.constant 0 : index
      %c0_30 = arith.constant 0 : index
      %35 = vector.load %arg6[%c0_29, %c0_30] : memref<16x16xf32, #tpu.memory_space<vmem>>, vector<16x16xf32>
      %36 = vector.broadcast %34 : vector<1x16xf32> to vector<16x16xf32>
      %37 = arith.mulf %35, %36 : vector<16x16xf32>
      %c0_31 = arith.constant 0 : index
      %c0_32 = arith.constant 0 : index
      %38 = vector.load %arg14[%c0_31, %c0_32] : memref<16x1xf32, #tpu.memory_space<vmem>>, vector<16x1xf32>
      %cst_33 = arith.constant dense<0.000000e+00> : vector<16x1xf32>
      %39 = tpu.matmul %37, %38, %cst_33 {dimension_numbers = #tpu.dot_dimension_numbers<[1], [0], [0], [1], [0, 0, 1, 1], [], []>} : vector<16x16xf32>, vector<16x1xf32>, vector<16x1xf32> -> vector<16x1xf32>
      %cst_34 = arith.constant 3.18877544E-4 : f32
      %40 = vector.broadcast %cst_34 : f32 to vector<16x1xf32>
      %41 = arith.mulf %39, %40 : vector<16x1xf32>
      %c0_35 = arith.constant 0 : index
      %c0_36 = arith.constant 0 : index
      %42 = vector.load %arg13[%c0_35, %c0_36] : memref<16x16xf32, #tpu.memory_space<vmem>>, vector<16x16xf32>
      %cst_37 = arith.constant dense<0.000000e+00> : vector<16x16xf32>
      %43 = tpu.matmul %37, %42, %cst_37 {dimension_numbers = #tpu.dot_dimension_numbers<[1], [0], [0], [1], [0, 0, 1, 1], [], []>} : vector<16x16xf32>, vector<16x16xf32>, vector<16x16xf32> -> vector<16x16xf32>
      %44 = arith.mulf %43, %37 : vector<16x16xf32>
      %cst_38 = arith.constant dense<0.000000e+00> : vector<16xf32>
      %45 = vector.multi_reduction <add>, %44, %cst_38 [1] : vector<16x16xf32> to vector<16xf32>
      %46 = vector.shape_cast %45 : vector<16xf32> to vector<16x1xf32>
      %cst_39 = arith.constant 3.18877544E-4 : f32
      %47 = vector.broadcast %cst_39 : f32 to vector<16x1xf32>
      %48 = arith.mulf %46, %47 : vector<16x1xf32>
      %49 = arith.mulf %41, %41 : vector<16x1xf32>
      %50 = arith.subf %48, %49 : vector<16x1xf32>
      %cst_40 = arith.constant 0.000000e+00 : f32
      %51 = vector.broadcast %cst_40 : f32 to vector<16x1xf32>
      %52 = arith.maximumf %50, %51 : vector<16x1xf32>
      %c0_41 = arith.constant 0 : index
      %c0_42 = arith.constant 0 : index
      %53 = vector.load %arg7[%c0_41, %c0_42] : memref<16x1xf32, #tpu.memory_space<vmem>>, vector<16x1xf32>
      %cst_43 = arith.constant 1.000000e-03 : f32
      %54 = vector.broadcast %cst_43 : f32 to vector<16x1xf32>
      %55 = arith.addf %52, %54 : vector<16x1xf32>
      %56 = math.rsqrt %55 : vector<16x1xf32>
      %57 = arith.mulf %53, %56 : vector<16x1xf32>
      %c0_44 = arith.constant 0 : index
      %c0_45 = arith.constant 0 : index
      %58 = vector.load %arg8[%c0_44, %c0_45] : memref<16x1xf32, #tpu.memory_space<vmem>>, vector<16x1xf32>
      %59 = arith.mulf %41, %57 : vector<16x1xf32>
      %60 = arith.subf %58, %59 : vector<16x1xf32>
      %c0_46 = arith.constant 0 : index
      %c0_47 = arith.constant 0 : index
      %61 = vector.load %arg9[%c0_46, %c0_47] : memref<72x16xf32, #tpu.memory_space<vmem>>, vector<72x16xf32>
      %62 = vector.broadcast %57 : vector<16x1xf32> to vector<16x16xf32>
      %63 = arith.mulf %62, %37 : vector<16x16xf32>
      %cst_48 = arith.constant dense<0.000000e+00> : vector<72x16xf32>
      %64 = tpu.matmul %61, %63, %cst_48 {dimension_numbers = #tpu.dot_dimension_numbers<[1], [0], [0], [1], [0, 0, 1, 1], [], []>} : vector<72x16xf32>, vector<16x16xf32>, vector<72x16xf32> -> vector<72x16xf32>
      %c0_49 = arith.constant 0 : index
      %c0_50 = arith.constant 0 : index
      %65 = vector.load %arg11[%c0_49, %c0_50] : memref<72x16xf32, #tpu.memory_space<vmem>>, vector<72x16xf32>
      tpu.vector_store %arg11[%c0_49, %c0_50], %64 {strides = array<i32>} : memref<72x16xf32, #tpu.memory_space<vmem>>, vector<72x16xf32>,
      %c0_51 = arith.constant 0 : index
      %c0_52 = arith.constant 0 : index
      %66 = vector.load %arg9[%c0_51, %c0_52] : memref<72x16xf32, #tpu.memory_space<vmem>>, vector<72x16xf32>
      %cst_53 = arith.constant dense<0.000000e+00> : vector<72x1xf32>
      %67 = tpu.matmul %66, %60, %cst_53 {dimension_numbers = #tpu.dot_dimension_numbers<[1], [0], [0], [1], [0, 0, 1, 1], [], []>} : vector<72x16xf32>, vector<16x1xf32>, vector<72x1xf32> -> vector<72x1xf32>
      %c0_54 = arith.constant 0 : index
      %c0_55 = arith.constant 0 : index
      %68 = vector.load %arg12[%c0_54, %c0_55] : memref<72x1xf32, #tpu.memory_space<vmem>>, vector<72x1xf32>
      tpu.vector_store %arg12[%c0_54, %c0_55], %67 {strides = array<i32>} : memref<72x1xf32, #tpu.memory_space<vmem>>, vector<72x1xf32>,
    } else {
    }
    return
  }
  func.func @transform_0(%arg0: i32) -> (i32, i32) {
    %c0_i32 = arith.constant 0 : i32
    %c0_i32_0 = arith.constant 0 : i32
    %c0_i32_1 = arith.constant 0 : i32
    return %c0_i32, %c0_i32_0 : i32, i32
  }
  func.func @transform_1(%arg0: i32) -> (i32, i32) {
    %c0_i32 = arith.constant 0 : i32
    %c0_i32_0 = arith.constant 0 : i32
    %c0_i32_1 = arith.constant 0 : i32
    return %c0_i32, %c0_i32_0 : i32, i32
  }
  func.func @transform_2(%arg0: i32) -> (i32, i32) {
    %c0_i32 = arith.constant 0 : i32
    %c0_i32_0 = arith.constant 0 : i32
    %c0_i32_1 = arith.constant 0 : i32
    return %c0_i32, %c0_i32_0 : i32, i32
  }
  func.func @transform_3(%arg0: i32) -> (i32, i32) {
    %c0_i32 = arith.constant 0 : i32
    %c0_i32_0 = arith.constant 0 : i32
    %c0_i32_1 = arith.constant 0 : i32
    return %c0_i32, %c0_i32_0 : i32, i32
  }
  func.func @transform_4(%arg0: i32) -> (i32, i32) {
    %c0_i32 = arith.constant 0 : i32
    %c0_i32_0 = arith.constant 0 : i32
    %c0_i32_1 = arith.constant 0 : i32
    return %c0_i32, %c0_i32_0 : i32, i32
  }
  func.func @transform_5(%arg0: i32) -> (i32, i32) {
    %c0_i32 = arith.constant 0 : i32
    %c0_i32_0 = arith.constant 0 : i32
    %c0_i32_1 = arith.constant 0 : i32
    return %c0_i32, %c0_i32_0 : i32, i32
  }
  func.func @transform_6(%arg0: i32) -> (i32, i32) {
    %c0_i32 = arith.constant 0 : i32
    %c0_i32_0 = arith.constant 0 : i32
    %c0_i32_1 = arith.constant 0 : i32
    return %c0_i32, %c0_i32_0 : i32, i32
  }
  func.func @transform_7(%arg0: i32) -> (i32, i32) {
    %c0_i32 = arith.constant 0 : i32
    %c0_i32_0 = arith.constant 0 : i32
    %c0_i32_1 = arith.constant 0 : i32
    return %c0_i32, %c0_i32_0 : i32, i32
  }
  func.func @transform_8(%arg0: i32) -> (i32, i32) {
    %c0_i32 = arith.constant 0 : i32
    %c0_i32_0 = arith.constant 0 : i32
    %c0_i32_1 = arith.constant 0 : i32
    return %c0_i32, %c0_i32_0 : i32, i32
  }
  func.func @transform_9(%arg0: i32) -> (i32, i32) {
    %c0_i32 = arith.constant 0 : i32
    %c0_i32_0 = arith.constant 0 : i32
    return %c0_i32, %arg0 : i32, i32
  }
  func.func @transform_10(%arg0: i32) -> (i32, i32) {
    %c0_i32 = arith.constant 0 : i32
    %c0_i32_0 = arith.constant 0 : i32
    %c0_i32_1 = arith.constant 0 : i32
    return %c0_i32, %c0_i32_0 : i32, i32
  }
  func.func @transform_11(%arg0: i32) -> (i32, i32) {
    %c0_i32 = arith.constant 0 : i32
    %c0_i32_0 = arith.constant 0 : i32
    %c0_i32_1 = arith.constant 0 : i32
    return %c0_i32, %c0_i32_0 : i32, i32
  }
}

</mosaic_0001>

<llo_original>
// kernel: tpu_custom_call.1
$region0: #{tpu_custom_call.1}
  #allocation0 [shape = 'u32[]', space=smem, size = 0x4, offset = 0x4, fixed_abs, tag = 'smem constant byte address 0x4 - core index']
  #allocation1 [shape = 'u32[72,128]{1,0:T(1,128)}', space=vmem, size = 0x9000, scoped, tag = 'internal scratch']
  #allocation2 [shape = 'f32[16,16]{1,0:T(8,128)}', space=vmem, size = 0x2000, scoped, tag = 'scratch operand']
  #allocation3 [shape = 'f32[16,1]{1,0:T(8,128)}', space=vmem, size = 0x2000, scoped, tag = 'scratch operand']
  %s0 = inlined_call_operand.vmem [shape: f32[1,16], index: 0, kind: input, shape index: {}]
  %s1 = inlined_call_operand.vmem [shape: f32[16,8], index: 1, kind: input, shape index: {}]
  %s2 = inlined_call_operand.vmem [shape: f32[1,8], index: 2, kind: input, shape index: {}]
  %s3 = inlined_call_operand.vmem [shape: f32[8,16], index: 3, kind: input, shape index: {}]
  %s4 = inlined_call_operand.vmem [shape: f32[1,16], index: 4, kind: input, shape index: {}]
  %s5 = inlined_call_operand.vmem [shape: f32[16,16], index: 5, kind: input, shape index: {}]
  %s6 = inlined_call_operand.vmem [shape: f32[16,1], index: 6, kind: input, shape index: {}]
  %s7 = inlined_call_operand.vmem [shape: f32[16,1], index: 7, kind: input, shape index: {}]
  %s8 = inlined_call_operand.vmem [shape: f32[72,16], index: 8, kind: input, shape index: {}]
  %s9 = inlined_call_operand.hbm [shape: f32[16,3200], index: 9, kind: input, shape index: {}]
  %s10 = inlined_call_operand.vmem [shape: f32[72,16], index: 10, kind: output, shape index: {0}]
  %s11 = inlined_call_operand.vmem [shape: f32[72,1], index: 11, kind: output, shape index: {1}]
  %12 = xla_tuple %s10, %s11
  %s13 = sld [smem:[#allocation0]]
  $region93: #{tpu_custom_call.1} parent=0
    _
  %s15 = ssub.s32 1, %s13
  %s16 = scalar_select 0, %s15, %s13
  $region1: #{tpu_custom_call.1} parent=0
    #allocation4 [shape = 'u8[81920]{0}', space=vmem, size = 0x14000, scoped, tag = 'input window, operand 9']
    #allocation5 [shape = 's32[2]{0}', space=sflag, size = 0x8, scoped, tag = 'scoped memory for tpu_custom_call.1']
    %17 = vsyncpa [#allocation5], 0
    %s18 = scalar_lea.sflag [#allocation5], 1
    %19 = vsyncpa %s18, 0
    loop: start=0, step=1, limit=7
    $region2: #{tpu_custom_call.1} parent=1 // loop_pre_header
      _
    $region3: #{tpu_custom_call.1} parent=1 // loop_header
      %s21 = sphi 0, %s25
      %p22 = scmp.ge.s32.totalorder %s21, 7
      %s29 = sphi 0, %s29
      %s31 = sphi 0, %s29
      %s32 = sphi 0, %s31
      %s46 = sphi 0, %s32
      %s50 = sphi 0, %s50
      %s52 = sphi 0, %s50
      %s53 = sphi 0, %s52
      %s67 = sphi 0, %s53
      %s71 = sphi 0, %s71
      %s73 = sphi 0, %s71
      %s74 = sphi 0, %s73
      %s88 = sphi 0, %s74
      %s92 = sphi 0, %s92
      %s94 = sphi 0, %s92
      %s95 = sphi 0, %s94
      %s109 = sphi 0, %s95
      %s113 = sphi 0, %s113
      %s115 = sphi 0, %s113
      %s116 = sphi 0, %s115
      %s130 = sphi 0, %s116
      %s134 = sphi 0, %s134
      %s136 = sphi 0, %s134
      %s137 = sphi 0, %s136
      %s151 = sphi 0, %s137
      %s155 = sphi 0, %s155
      %s157 = sphi 0, %s155
      %s158 = sphi 0, %s157
      %s172 = sphi 0, %s158
      %s176 = sphi 0, %s176
      %s178 = sphi 0, %s176
      %s179 = sphi 0, %s178
      %s193 = sphi 0, %s179
      %s197 = sphi 0, %s197
      %s199 = sphi 0, %s197
      %s200 = sphi 0, %s199
      %s214 = sphi 0, %s200
      %s220 = sphi 0, %s222
      %s223 = sphi 0, %s220
      %s224 = sphi 0, %s223
      %s240 = sphi 0, %s224
      %s244 = sphi 0, %s244
      %s246 = sphi 0, %s244
      %s247 = sphi 0, %s246
      %s261 = sphi 0, %s247
      %s265 = sphi 0, %s265
      %s267 = sphi 0, %s265
      %s268 = sphi 0, %s267
      %s282 = sphi 0, %s268
    $region4: #{tpu_custom_call.1} parent=1 // loop_header_branch
      %24 = sbr.rel (%p22) target = $region8
    $region5: #{tpu_custom_call.1} parent=1 // loop_body
      %s26 = ssub.s32 %s21, 1
      %s27 = ssub.s32 %s21, 2
      %s28 = sadd.s32 %s21, 1
      %s30 = sadd.s32 %s29, 1
      %p33 = scmp.eq.s32.totalorder %s21, 4
      %p34 = scmp.ne.s32.totalorder %s29, %s31
      %p35 = scmp.eq.s32.totalorder %s21, 0
      %p36 = por %p34, %p35
      %p37 = scmp.ne.s32.totalorder %s29, %s31
      %p38 = scmp.eq.s32.totalorder %s26, 4
      %p39 = por %p37, %p38
      %p40 = scmp.ne.s32.totalorder %s31, %s32
      %p41 = scmp.eq.s32.totalorder %s26, 0
      %p42 = por %p40, %p41
      %p43 = scmp.ne.s32.totalorder %s31, %s32
      %p44 = scmp.eq.s32.totalorder %s27, 4
      %p45 = por %p43, %p44
      %p47 = scmp.ne.s32.totalorder %s32, %s46
      %p48 = scmp.eq.s32.totalorder %s27, 0
      %p49 = por %p47, %p48
      %s51 = sadd.s32 %s50, 1
      %p54 = scmp.eq.s32.totalorder %s21, 4
      %p55 = scmp.ne.s32.totalorder %s50, %s52
      %p56 = scmp.eq.s32.totalorder %s21, 0
      %p57 = por %p55, %p56
      %p58 = scmp.ne.s32.totalorder %s50, %s52
      %p59 = scmp.eq.s32.totalorder %s26, 4
      %p60 = por %p58, %p59
      %p61 = scmp.ne.s32.totalorder %s52, %s53
      %p62 = scmp.eq.s32.totalorder %s26, 0
      %p63 = por %p61, %p62
      %p64 = scmp.ne.s32.totalorder %s52, %s53
      %p65 = scmp.eq.s32.totalorder %s27, 4
      %p66 = por %p64, %p65
      %p68 = scmp.ne.s32.totalorder %s53, %s67
      %p69 = scmp.eq.s32.totalorder %s27, 0
      %p70 = por %p68, %p69
      %s72 = sadd.s32 %s71, 1
      %p75 = scmp.eq.s32.totalorder %s21, 4
      %p76 = scmp.ne.s32.totalorder %s71, %s73
      %p77 = scmp.eq.s32.totalorder %s21, 0
      %p78 = por %p76, %p77
      %p79 = scmp.ne.s32.totalorder %s71, %s73
      %p80 = scmp.eq.s32.totalorder %s26, 4
      %p81 = por %p79, %p80
      %p82 = scmp.ne.s32.totalorder %s73, %s74
      %p83 = scmp.eq.s32.totalorder %s26, 0
      %p84 = por %p82, %p83
      %p85 = scmp.ne.s32.totalorder %s73, %s74
      %p86 = scmp.eq.s32.totalorder %s27, 4
      %p87 = por %p85, %p86
      %p89 = scmp.ne.s32.totalorder %s74, %s88
      %p90 = scmp.eq.s32.totalorder %s27, 0
      %p91 = por %p89, %p90
      %s93 = sadd.s32 %s92, 1
      %p96 = scmp.eq.s32.totalorder %s21, 4
      %p97 = scmp.ne.s32.totalorder %s92, %s94
      %p98 = scmp.eq.s32.totalorder %s21, 0
      %p99 = por %p97, %p98
      %p100 = scmp.ne.s32.totalorder %s92, %s94
      %p101 = scmp.eq.s32.totalorder %s26, 4
      %p102 = por %p100, %p101
      %p103 = scmp.ne.s32.totalorder %s94, %s95
      %p104 = scmp.eq.s32.totalorder %s26, 0
      %p105 = por %p103, %p104
      %p106 = scmp.ne.s32.totalorder %s94, %s95
      %p107 = scmp.eq.s32.totalorder %s27, 4
      %p108 = por %p106, %p107
      %p110 = scmp.ne.s32.totalorder %s95, %s109
      %p111 = scmp.eq.s32.totalorder %s27, 0
      %p112 = por %p110, %p111
      %s114 = sadd.s32 %s113, 1
      %p117 = scmp.eq.s32.totalorder %s21, 4
      %p118 = scmp.ne.s32.totalorder %s113, %s115
      %p119 = scmp.eq.s32.totalorder %s21, 0
      %p120 = por %p118, %p119
      %p121 = scmp.ne.s32.totalorder %s113, %s115
      %p122 = scmp.eq.s32.totalorder %s26, 4
      %p123 = por %p121, %p122
      %p124 = scmp.ne.s32.totalorder %s115, %s116
      %p125 = scmp.eq.s32.totalorder %s26, 0
      %p126 = por %p124, %p125
      %p127 = scmp.ne.s32.totalorder %s115, %s116
      %p128 = scmp.eq.s32.totalorder %s27, 4
      %p129 = por %p127, %p128
      %p131 = scmp.ne.s32.totalorder %s116, %s130
      %p132 = scmp.eq.s32.totalorder %s27, 0
      %p133 = por %p131, %p132
      %s135 = sadd.s32 %s134, 1
      %p138 = scmp.eq.s32.totalorder %s21, 4
      %p139 = scmp.ne.s32.totalorder %s134, %s136
      %p140 = scmp.eq.s32.totalorder %s21, 0
      %p141 = por %p139, %p140
      %p142 = scmp.ne.s32.totalorder %s134, %s136
      %p143 = scmp.eq.s32.totalorder %s26, 4
      %p144 = por %p142, %p143
      %p145 = scmp.ne.s32.totalorder %s136, %s137
      %p146 = scmp.eq.s32.totalorder %s26, 0
      %p147 = por %p145, %p146
      %p148 = scmp.ne.s32.totalorder %s136, %s137
      %p149 = scmp.eq.s32.totalorder %s27, 4
      %p150 = por %p148, %p149
      %p152 = scmp.ne.s32.totalorder %s137, %s151
      %p153 = scmp.eq.s32.totalorder %s27, 0
      %p154 = por %p152, %p153
      %s156 = sadd.s32 %s155, 1
      %p159 = scmp.eq.s32.totalorder %s21, 4
      %p160 = scmp.ne.s32.totalorder %s155, %s157
      %p161 = scmp.eq.s32.totalorder %s21, 0
      %p162 = por %p160, %p161
      %p163 = scmp.ne.s32.totalorder %s155, %s157
      %p164 = scmp.eq.s32.totalorder %s26, 4
      %p165 = por %p163, %p164
      %p166 = scmp.ne.s32.totalorder %s157, %s158
      %p167 = scmp.eq.s32.totalorder %s26, 0
      %p168 = por %p166, %p167
      %p169 = scmp.ne.s32.totalorder %s157, %s158
      %p170 = scmp.eq.s32.totalorder %s27, 4
      %p171 = por %p169, %p170
      %p173 = scmp.ne.s32.totalorder %s158, %s172
      %p174 = scmp.eq.s32.totalorder %s27, 0
      %p175 = por %p173, %p174
      %s177 = sadd.s32 %s176, 1
      %p180 = scmp.eq.s32.totalorder %s21, 4
      %p181 = scmp.ne.s32.totalorder %s176, %s178
      %p182 = scmp.eq.s32.totalorder %s21, 0
      %p183 = por %p181, %p182
      %p184 = scmp.ne.s32.totalorder %s176, %s178
      %p185 = scmp.eq.s32.totalorder %s26, 4
      %p186 = por %p184, %p185
      %p187 = scmp.ne.s32.totalorder %s178, %s179
      %p188 = scmp.eq.s32.totalorder %s26, 0
      %p189 = por %p187, %p188
      %p190 = scmp.ne.s32.totalorder %s178, %s179
      %p191 = scmp.eq.s32.totalorder %s27, 4
      %p192 = por %p190, %p191
      %p194 = scmp.ne.s32.totalorder %s179, %s193
      %p195 = scmp.eq.s32.totalorder %s27, 0
      %p196 = por %p194, %p195
      %s198 = sadd.s32 %s197, 1
      %p201 = scmp.eq.s32.totalorder %s21, 4
      %p202 = scmp.ne.s32.totalorder %s197, %s199
      %p203 = scmp.eq.s32.totalorder %s21, 0
      %p204 = por %p202, %p203
      %p205 = scmp.ne.s32.totalorder %s197, %s199
      %p206 = scmp.eq.s32.totalorder %s26, 4
      %p207 = por %p205, %p206
      %p208 = scmp.ne.s32.totalorder %s199, %s200
      %p209 = scmp.eq.s32.totalorder %s26, 0
      %p210 = por %p208, %p209
      %p211 = scmp.ne.s32.totalorder %s199, %s200
      %p212 = scmp.eq.s32.totalorder %s27, 4
      %p213 = por %p211, %p212
      %p215 = scmp.ne.s32.totalorder %s200, %s214
      %p216 = scmp.eq.s32.totalorder %s27, 0
      %p217 = por %p215, %p216
      %s218 = ssub.s32 %s21, %s28
      %p219 = scmp.eq.s32.totalorder %s218, 0
      %s221 = sadd.s32 %s220, 1
      %s222 = scalar_select %p219, %s220, %s221
      %p225 = pneg %p219
      %p226 = scmp.eq.s32.totalorder %s21, 4
      %p227 = por %p225, %p226
      %p228 = scmp.ne.s32.totalorder %s220, %s223
      %p229 = scmp.eq.s32.totalorder %s21, 0
      %p230 = por %p228, %p229
      %p231 = scmp.ne.s32.totalorder %s220, %s223
      %p232 = scmp.eq.s32.totalorder %s26, 4
      %p233 = por %p231, %p232
      %p234 = scmp.ne.s32.totalorder %s223, %s224
      %p235 = scmp.eq.s32.totalorder %s26, 0
      %p236 = por %p234, %p235
      %p237 = scmp.ne.s32.totalorder %s223, %s224
      %p238 = scmp.eq.s32.totalorder %s27, 4
      %p239 = por %p237, %p238
      %p241 = scmp.ne.s32.totalorder %s224, %s240
      %p242 = scmp.eq.s32.totalorder %s27, 0
      %p243 = por %p241, %p242
      %s245 = sadd.s32 %s244, 1
      %p248 = scmp.eq.s32.totalorder %s21, 4
      %p249 = scmp.ne.s32.totalorder %s244, %s246
      %p250 = scmp.eq.s32.totalorder %s21, 0
      %p251 = por %p249, %p250
      %p252 = scmp.ne.s32.totalorder %s244, %s246
      %p253 = scmp.eq.s32.totalorder %s26, 4
      %p254 = por %p252, %p253
      %p255 = scmp.ne.s32.totalorder %s246, %s247
      %p256 = scmp.eq.s32.totalorder %s26, 0
      %p257 = por %p255, %p256
      %p258 = scmp.ne.s32.totalorder %s246, %s247
      %p259 = scmp.eq.s32.totalorder %s27, 4
      %p260 = por %p258, %p259
      %p262 = scmp.ne.s32.totalorder %s247, %s261
      %p263 = scmp.eq.s32.totalorder %s27, 0
      %p264 = por %p262, %p263
      %s266 = sadd.s32 %s265, 1
      %p269 = scmp.eq.s32.totalorder %s21, 4
      %p270 = scmp.ne.s32.totalorder %s265, %s267
      %p271 = scmp.eq.s32.totalorder %s21, 0
      %p272 = por %p270, %p271
      %p273 = scmp.ne.s32.totalorder %s265, %s267
      %p274 = scmp.eq.s32.totalorder %s26, 4
      %p275 = por %p273, %p274
      %p276 = scmp.ne.s32.totalorder %s267, %s268
      %p277 = scmp.eq.s32.totalorder %s26, 0
      %p278 = por %p276, %p277
      %p279 = scmp.ne.s32.totalorder %s267, %s268
      %p280 = scmp.eq.s32.totalorder %s27, 4
      %p281 = por %p279, %p280
      %p283 = scmp.ne.s32.totalorder %s268, %s282
      %p284 = scmp.eq.s32.totalorder %s27, 0
      %p285 = por %p283, %p284
      %p286 = scmp.le.s32.totalorder 1, %s21
      %p287 = scmp.lt.s32.totalorder %s21, 6
      %p288 = pnand %p286, %p287
      %p289 = pneg %p288
      // Predicated region
      $region9: #{tpu_custom_call.1} parent=5 // pred_check
        _
      $region10: #{tpu_custom_call.1} parent=5 // pred_check_branch
        %291 = sbr.rel (%p288) target = $region12
      $region11: #{tpu_custom_call.1} parent=5 // pred_region
        %s292 = ssub.s32 %s21, 1
        // Predicated region
        $region13: #{tpu_custom_call.1} parent=11 // pred_check
          %p293 = pneg %p42
        $region14: #{tpu_custom_call.1} parent=11 // pred_check_branch
          %295 = sbr.rel (%p293) target = $region16
        $region15: #{tpu_custom_call.1} parent=11 // pred_region
          _
        $region16: #{tpu_custom_call.1} parent=11 // pred_fallthru
          _
        // Predicated region
        $region17: #{tpu_custom_call.1} parent=11 // pred_check
          %p296 = pneg %p63
        $region18: #{tpu_custom_call.1} parent=11 // pred_check_branch
          %298 = sbr.rel (%p296) target = $region20
        $region19: #{tpu_custom_call.1} parent=11 // pred_region
          _
        $region20: #{tpu_custom_call.1} parent=11 // pred_fallthru
          _
        // Predicated region
        $region21: #{tpu_custom_call.1} parent=11 // pred_check
          %p299 = pneg %p84
        $region22: #{tpu_custom_call.1} parent=11 // pred_check_branch
          %301 = sbr.rel (%p299) target = $region24
        $region23: #{tpu_custom_call.1} parent=11 // pred_region
          _
        $region24: #{tpu_custom_call.1} parent=11 // pred_fallthru
          _
        // Predicated region
        $region25: #{tpu_custom_call.1} parent=11 // pred_check
          %p302 = pneg %p105
        $region26: #{tpu_custom_call.1} parent=11 // pred_check_branch
          %304 = sbr.rel (%p302) target = $region28
        $region27: #{tpu_custom_call.1} parent=11 // pred_region
          _
        $region28: #{tpu_custom_call.1} parent=11 // pred_fallthru
          _
        // Predicated region
        $region29: #{tpu_custom_call.1} parent=11 // pred_check
          %p305 = pneg %p126
        $region30: #{tpu_custom_call.1} parent=11 // pred_check_branch
          %307 = sbr.rel (%p305) target = $region32
        $region31: #{tpu_custom_call.1} parent=11 // pred_region
          _
        $region32: #{tpu_custom_call.1} parent=11 // pred_fallthru
          _
        // Predicated region
        $region33: #{tpu_custom_call.1} parent=11 // pred_check
          %p308 = pneg %p147
        $region34: #{tpu_custom_call.1} parent=11 // pred_check_branch
          %310 = sbr.rel (%p308) target = $region36
        $region35: #{tpu_custom_call.1} parent=11 // pred_region
          _
        $region36: #{tpu_custom_call.1} parent=11 // pred_fallthru
          _
        // Predicated region
        $region37: #{tpu_custom_call.1} parent=11 // pred_check
          %p311 = pneg %p168
        $region38: #{tpu_custom_call.1} parent=11 // pred_check_branch
          %313 = sbr.rel (%p311) target = $region40
        $region39: #{tpu_custom_call.1} parent=11 // pred_region
          _
        $region40: #{tpu_custom_call.1} parent=11 // pred_fallthru
          _
        // Predicated region
        $region41: #{tpu_custom_call.1} parent=11 // pred_check
          %p314 = pneg %p189
        $region42: #{tpu_custom_call.1} parent=11 // pred_check_branch
          %316 = sbr.rel (%p314) target = $region44
        $region43: #{tpu_custom_call.1} parent=11 // pred_region
          _
        $region44: #{tpu_custom_call.1} parent=11 // pred_fallthru
          _
        // Predicated region
        $region45: #{tpu_custom_call.1} parent=11 // pred_check
          %p317 = pneg %p210
        $region46: #{tpu_custom_call.1} parent=11 // pred_check_branch
          %319 = sbr.rel (%p317) target = $region48
        $region47: #{tpu_custom_call.1} parent=11 // pred_region
          _
        $region48: #{tpu_custom_call.1} parent=11 // pred_fallthru
          _
      $region12: #{tpu_custom_call.1} parent=5 // pred_fallthru
        _
      %p320 = scmp.lt.s32.totalorder %s21, 5
      // Predicated region
      $region49: #{tpu_custom_call.1} parent=5 // pred_check
        %p321 = pneg %p320
      $region50: #{tpu_custom_call.1} parent=5 // pred_check_branch
        %323 = sbr.rel (%p321) target = $region52
      $region51: #{tpu_custom_call.1} parent=5 // pred_region
        // Predicated region
        $region53: #{tpu_custom_call.1} parent=51 // pred_check
          %p324 = pneg %p230
        $region54: #{tpu_custom_call.1} parent=51 // pred_check_branch
          %326 = sbr.rel (%p324) target = $region56
        $region55: #{tpu_custom_call.1} parent=51 // pred_region
          %s327 = sand.u32 %s220, 1
          %s328 = scalar_lea.sflag [#allocation5], %s327
          %s329 = sand.u32 %s220, 1
          %s330 = smul.addr %s329, 80
          %s331 = scalar_lea.vmem [#allocation4], %s330
          %s332 = smul.u32 5, %s21
          %334 = vsyncadd %s328, 0
          %s335 = smul.addr %s332, 8
          %s336 = scalar_lea.hbm %s9, %s335
          %s337 = sshll.u32 %s336, 4
          %s338 = int_to_ptr.hbm [resolvable:$true] %s337
          %s339 = sshll.u32 %s331, 4
          %s340 = int_to_ptr.vmem [resolvable:$true] %s339
          %345 = dma.hbm_to_vmem [thread:$0]  %s338, 1280, %s340, %s328, 3200, 640, 40
        $region56: #{tpu_custom_call.1} parent=51 // pred_fallthru
          _
      $region52: #{tpu_custom_call.1} parent=5 // pred_fallthru
        _
      %p346 = scmp.le.s32.totalorder 1, %s21
      %p347 = scmp.lt.s32.totalorder %s21, 6
      %p348 = pnand %p346, %p347
      %p349 = pneg %p348
      // Predicated region
      $region57: #{tpu_custom_call.1} parent=5 // pred_check
        _
      $region58: #{tpu_custom_call.1} parent=5 // pred_check_branch
        %351 = sbr.rel (%p348) target = $region60
      $region59: #{tpu_custom_call.1} parent=5 // pred_region
        %s352 = ssub.s32 %s21, 1
        %s353 = sand.u32 %s223, 1
        %s354 = scalar_lea.sflag [#allocation5], %s353
        %s355 = sand.u32 %s223, 1
        %s356 = smul.addr %s355, 80
        %s357 = scalar_lea.vmem [#allocation4], %s356
        // Predicated region
        $region61: #{tpu_custom_call.1} parent=59 // pred_check
          %p358 = pneg %p236
        $region62: #{tpu_custom_call.1} parent=59 // pred_check_branch
          %360 = sbr.rel (%p358) target = $region64
        $region63: #{tpu_custom_call.1} parent=59 // pred_region
          %362 = dma.done %s354, 1280
        $region64: #{tpu_custom_call.1} parent=59 // pred_fallthru
          _
        %p363 = pneg %p42
        %p364 = pneg %p39
        %p365 = pneg %p63
        %p366 = pneg %p60
        %p367 = pneg %p84
        %p368 = pneg %p81
        %p369 = pneg %p105
        %p370 = pneg %p102
        %p371 = pneg %p126
        %p372 = pneg %p123
        %p373 = pneg %p147
        %p374 = pneg %p144
        %p375 = pneg %p168
        %p376 = pneg %p165
        %p377 = pneg %p189
        %p378 = pneg %p186
        %p379 = pneg %p210
        %p380 = pneg %p207
        %s381 = sand.u32 %s223, 1
        %s382 = scalar_lea.sflag [#allocation5], %s381
        %s383 = sand.u32 %s223, 1
        %s384 = smul.addr %s383, 80
        %s385 = scalar_lea.vmem [#allocation4], %s384
        %p386 = pneg %p236
        %p387 = pneg %p233
        %p388 = pneg %p257
        %p389 = pneg %p254
        %p390 = pneg %p278
        %p391 = pneg %p275
        %s392 = smul.u32 5, %s26
        %p393 = scmp.eq.s32.totalorder %s26, 0
        // Predicated region
        $region65: #{tpu_custom_call.1} parent=59 // pred_check
          %p394 = pneg %p393
        $region66: #{tpu_custom_call.1} parent=59 // pred_check_branch
          %396 = sbr.rel (%p394) target = $region68
        $region67: #{tpu_custom_call.1} parent=59 // pred_region
          %vm397 = vcmask 130048
          %398 = vst.msk [vmem:[#allocation2] sm:$0xff] %vm397, 0.0
          %399 = vst.msk [vmem:[#allocation2 + $0x8] sm:$0xff] %vm397, 0.0
          %vm400 = vcmask 7168
          %401 = vst.msk [vmem:[#allocation3] sm:$0xff] %vm400, 0.0
          %402 = vst.msk [vmem:[#allocation3 + $0x8] sm:$0xff] %vm400, 0.0
        $region68: #{tpu_custom_call.1} parent=59 // pred_fallthru
          _
        %v403 = vld [vmem:[%s357] sm:$0xff]
        %v404 = vld [vmem:[%s357 + $0x8] sm:$0xff]
        %v405 = vld [vmem:[%s357 + $0x10] sm:$0xff]
        %v406 = vld [vmem:[%s357 + $0x18] sm:$0xff]
        %v407 = vld [vmem:[%s357 + $0x20] sm:$0xff]
        %v408 = vld [vmem:[%s357 + $0x28] sm:$0xff]
        %v409 = vld [vmem:[%s357 + $0x30] sm:$0xff]
        %v410 = vld [vmem:[%s357 + $0x38] sm:$0xff]
        %v411 = vld [vmem:[%s357 + $0x40] sm:$0xff]
        %v412 = vld [vmem:[%s357 + $0x48] sm:$0xff]
        %v413 = vld [vmem:[#allocation2] sm:$0xff]
        %v414 = vld [vmem:[#allocation2 + $0x8] sm:$0xff]
        %415 = vmatpush.xpose.msra.mxu0 0.0
        %416 = vmatpush.xpose.msra.mxu0 0.0
        %417 = vmatpush.xpose.msra.mxu0 0.0
        %418 = vmatpush.xpose.msra.mxu0 0.0
        %419 = vmatpush.xpose.msra.mxu0 0.0
        %420 = vmatpush.xpose.msra.mxu0 0.0
        %421 = vmatpush.xpose.msra.mxu0 0.0
        %422 = vmatpush.xpose.msra.mxu0 0.0
        %423 = vmatpush.xpose.msra.mxu0 0.0
        %424 = vmatpush.xpose.msra.mxu0 0.0
        %425 = vmatpush.xpose.msra.mxu0 0.0
        %426 = vmatpush.xpose.msra.mxu0 0.0
        %427 = vmatpush.xpose.msra.mxu0 0.0
        %428 = vmatpush.xpose.msra.mxu0 0.0
        %429 = vmatpush.xpose.msra.mxu0 %v408
        %430 = vmatpush.xpose.msra.mxu0 %v403
        %431 = vmatmul.f32.gmra.mxu0 %v403
        %v432 = vpop.f32.mrf.mxu0
        %v433 = vadd.f32 0.0, %v432
        %434 = vmatmul.f32.gmra.mxu0 %v408
        %v435 = vpop.f32.mrf.mxu0
        %v436 = vadd.f32 0.0, %v435
        %437 = vdwg.mxu0
        %438 = vmatpush.xpose.msra.mxu0 0.0
        %439 = vmatpush.xpose.msra.mxu0 0.0
        %440 = vmatpush.xpose.msra.mxu0 0.0
        %441 = vmatpush.xpose.msra.mxu0 0.0
        %442 = vmatpush.xpose.msra.mxu0 0.0
        %443 = vmatpush.xpose.msra.mxu0 0.0
        %444 = vmatpush.xpose.msra.mxu0 0.0
        %445 = vmatpush.xpose.msra.mxu0 0.0
        %446 = vmatpush.xpose.msra.mxu0 0.0
        %447 = vmatpush.xpose.msra.mxu0 0.0
        %448 = vmatpush.xpose.msra.mxu0 0.0
        %449 = vmatpush.xpose.msra.mxu0 0.0
        %450 = vmatpush.xpose.msra.mxu0 0.0
        %451 = vmatpush.xpose.msra.mxu0 0.0
        %452 = vmatpush.xpose.msra.mxu0 %v409
        %453 = vmatpush.xpose.msra.mxu0 %v404
        %454 = vmatmul.f32.gmra.mxu0 %v404
        %v455 = vpop.f32.mrf.mxu0
        %v456 = vadd.f32 %v433, %v455
        %457 = vmatmul.f32.gmra.mxu0 %v409
        %v458 = vpop.f32.mrf.mxu0
        %v459 = vadd.f32 %v436, %v458
        %460 = vdwg.mxu0
        %461 = vmatpush.xpose.msra.mxu0 0.0
        %462 = vmatpush.xpose.msra.mxu0 0.0
        %463 = vmatpush.xpose.msra.mxu0 0.0
        %464 = vmatpush.xpose.msra.mxu0 0.0
        %465 = vmatpush.xpose.msra.mxu0 0.0
        %466 = vmatpush.xpose.msra.mxu0 0.0
        %467 = vmatpush.xpose.msra.mxu0 0.0
        %468 = vmatpush.xpose.msra.mxu0 0.0
        %469 = vmatpush.xpose.msra.mxu0 0.0
        %470 = vmatpush.xpose.msra.mxu0 0.0
        %471 = vmatpush.xpose.msra.mxu0 0.0
        %472 = vmatpush.xpose.msra.mxu0 0.0
        %473 = vmatpush.xpose.msra.mxu0 0.0
        %474 = vmatpush.xpose.msra.mxu0 0.0
        %475 = vmatpush.xpose.msra.mxu0 %v410
        %476 = vmatpush.xpose.msra.mxu0 %v405
        %477 = vmatmul.f32.gmra.mxu0 %v405
        %v478 = vpop.f32.mrf.mxu0
        %v479 = vadd.f32 %v456, %v478
        %480 = vmatmul.f32.gmra.mxu0 %v410
        %v481 = vpop.f32.mrf.mxu0
        %v482 = vadd.f32 %v459, %v481
        %483 = vdwg.mxu0
        %484 = vmatpush.xpose.msra.mxu0 0.0
        %485 = vmatpush.xpose.msra.mxu0 0.0
        %486 = vmatpush.xpose.msra.mxu0 0.0
        %487 = vmatpush.xpose.msra.mxu0 0.0
        %488 = vmatpush.xpose.msra.mxu0 0.0
        %489 = vmatpush.xpose.msra.mxu0 0.0
        %490 = vmatpush.xpose.msra.mxu0 0.0
        %491 = vmatpush.xpose.msra.mxu0 0.0
        %492 = vmatpush.xpose.msra.mxu0 0.0
        %493 = vmatpush.xpose.msra.mxu0 0.0
        %494 = vmatpush.xpose.msra.mxu0 0.0
        %495 = vmatpush.xpose.msra.mxu0 0.0
        %496 = vmatpush.xpose.msra.mxu0 0.0
        %497 = vmatpush.xpose.msra.mxu0 0.0
        %498 = vmatpush.xpose.msra.mxu0 %v411
        %499 = vmatpush.xpose.msra.mxu0 %v406
        %500 = vmatmul.f32.gmra.mxu0 %v406
        %v501 = vpop.f32.mrf.mxu0
        %v502 = vadd.f32 %v479, %v501
        %503 = vmatmul.f32.gmra.mxu0 %v411
        %v504 = vpop.f32.mrf.mxu0
        %v505 = vadd.f32 %v482, %v504
        %506 = vdwg.mxu0
        %507 = vmatpush.xpose.msra.mxu0 0.0
        %508 = vmatpush.xpose.msra.mxu0 0.0
        %509 = vmatpush.xpose.msra.mxu0 0.0
        %510 = vmatpush.xpose.msra.mxu0 0.0
        %511 = vmatpush.xpose.msra.mxu0 0.0
        %512 = vmatpush.xpose.msra.mxu0 0.0
        %513 = vmatpush.xpose.msra.mxu0 0.0
        %514 = vmatpush.xpose.msra.mxu0 0.0
        %515 = vmatpush.xpose.msra.mxu0 0.0
        %516 = vmatpush.xpose.msra.mxu0 0.0
        %517 = vmatpush.xpose.msra.mxu0 0.0
        %518 = vmatpush.xpose.msra.mxu0 0.0
        %519 = vmatpush.xpose.msra.mxu0 0.0
        %520 = vmatpush.xpose.msra.mxu0 0.0
        %521 = vmatpush.xpose.msra.mxu0 %v412
        %522 = vmatpush.xpose.msra.mxu0 %v407
        %523 = vmatmul.f32.gmra.mxu0 %v407
        %v524 = vpop.f32.mrf.mxu0
        %v525 = vadd.f32 %v502, %v524
        %526 = vmatmul.f32.gmra.mxu0 %v412
        %v527 = vpop.f32.mrf.mxu0
        %v528 = vadd.f32 %v505, %v527
        %529 = vdwg.mxu0
        %v530 = vadd.f32 %v413, %v525
        %v531 = vadd.f32 %v414, %v528
        %vm532 = vcmask 130048
        %533 = vst.msk [vmem:[#allocation2] sm:$0xff] %vm532, %v530
        %534 = vst.msk [vmem:[#allocation2 + $0x8] sm:$0xff] %vm532, %v531
        %v535 = vld [vmem:[#allocation3] sm:$0xff]
        %v536 = vld [vmem:[#allocation3 + $0x8] sm:$0xff]
        %v537 = vadd.f32 %v403, %v404
        %v538 = vadd.f32 %v537, %v405
        %v539 = vadd.f32 %v538, %v406
        %v540 = vadd.f32 %v539, %v407
        %541 = vadd.xlane.f32.xlu0 %v540
        %v542 = vpop.xlane.xlu0 %541
        %v543 = vadd.f32 %v408, %v409
        %v544 = vadd.f32 %v543, %v410
        %v545 = vadd.f32 %v544, %v411
        %v546 = vadd.f32 %v545, %v412
        %547 = vadd.xlane.f32.xlu0 %v546
        %v548 = vpop.xlane.xlu0 %547
        %v549 = vadd.f32 %v535, %v542
        %v550 = vadd.f32 %v536, %v548
        %vm551 = vcmask 7168
        %552 = vst.msk [vmem:[#allocation3] sm:$0xff] %vm551, %v549
        %553 = vst.msk [vmem:[#allocation3 + $0x8] sm:$0xff] %vm551, %v550
        %p554 = scmp.eq.s32.totalorder %s26, 4
        // Predicated region
        $region69: #{tpu_custom_call.1} parent=59 // pred_check
          %p555 = pneg %p554
        $region70: #{tpu_custom_call.1} parent=59 // pred_check_branch
          %557 = sbr.rel (%p555) target = $region72
        $region71: #{tpu_custom_call.1} parent=59 // pred_region
          %v558 = vld [vmem:[%s0] sm:$0x1]
          %v559 = vld [vmem:[%s1] sm:$0xff]
          %v560 = vld [vmem:[%s1 + $0x8] sm:$0xff]
          %v561 = vld [vmem:[%s2] sm:$0x1]
          %v563 = vsel %vm532, %v558, 0
          %565 = vmatpush.msra.mxu0 0.0
          %566 = vmatpush.msra.mxu0 0.0
          %567 = vmatpush.msra.mxu0 0.0
          %568 = vmatpush.msra.mxu0 0.0
          %569 = vmatpush.msra.mxu0 0.0
          %570 = vmatpush.msra.mxu0 0.0
          %571 = vmatpush.msra.mxu0 0.0
          %572 = vmatpush.msra.mxu0 0.0
          %573 = vmatpush.msra.mxu0 0.0
          %574 = vmatpush.msra.mxu0 0.0
          %575 = vmatpush.msra.mxu0 0.0
          %576 = vmatpush.msra.mxu0 0.0
          %577 = vmatpush.msra.mxu0 0.0
          %578 = vmatpush.msra.mxu0 0.0
          %579 = vmatpush.msra.mxu0 %v560
          %580 = vmatpush.msra.mxu0 %v559
          %581 = vmatmul.f32.gmra.mxu0 %v563
          %v582 = vpop.f32.mrf.mxu0
          %v583 = vadd.f32 %v561, %v582
          %584 = vdwg.mxu0
          %v585 = vmax.f32 %v583, 0.0
          %v586 = vld [vmem:[%s3] sm:$0xff]
          %v587 = vld [vmem:[%s4] sm:$0x1]
          %vm588 = vcmask 64512
          %v590 = vsel %vm588, %v585, 0
          %592 = vmatpush.msra.mxu0 0.0
          %593 = vmatpush.msra.mxu0 0.0
          %594 = vmatpush.msra.mxu0 0.0
          %595 = vmatpush.msra.mxu0 0.0
          %596 = vmatpush.msra.mxu0 0.0
          %597 = vmatpush.msra.mxu0 0.0
          %598 = vmatpush.msra.mxu0 0.0
          %599 = vmatpush.msra.mxu0 0.0
          %600 = vmatpush.msra.mxu0 0.0
          %601 = vmatpush.msra.mxu0 0.0
          %602 = vmatpush.msra.mxu0 0.0
          %603 = vmatpush.msra.mxu0 0.0
          %604 = vmatpush.msra.mxu0 0.0
          %605 = vmatpush.msra.mxu0 0.0
          %606 = vmatpush.msra.mxu0 0.0
          %607 = vmatpush.msra.mxu0 %v586
          %608 = vmatmul.f32.gmra.mxu0 %v590
          %v609 = vpop.f32.mrf.mxu0
          %v610 = vadd.f32 %v587, %v609
          %611 = vdwg.mxu0
          %v612 = vadd.f32 %v610, 3.0
          %v613 = vmax.f32 %v612, 0.0
          %v614 = vmin.f32 %v613, 6.0
          %v615 = vmul.f32 %v614, 0.16666667
          %v616 = vld [vmem:[%s5] sm:$0xff]
          %v617 = vld [vmem:[%s5 + $0x8] sm:$0xff]
          %v618 = vperm.slane %v615, 0
          %v619 = vmul.f32 %v616, %v618
          %v620 = vmul.f32 %v617, %v618
          %v621 = vld [vmem:[#allocation3] sm:$0xff]
          %v622 = vld [vmem:[#allocation3 + $0x8] sm:$0xff]
          %v624 = vsel %vm532, %v619, 0
          %v627 = vsel %vm532, %v620, 0
          %629 = vmatpush.msra.mxu0 0.0
          %630 = vmatpush.msra.mxu0 0.0
          %631 = vmatpush.msra.mxu0 0.0
          %632 = vmatpush.msra.mxu0 0.0
          %633 = vmatpush.msra.mxu0 0.0
          %634 = vmatpush.msra.mxu0 0.0
          %635 = vmatpush.msra.mxu0 0.0
          %636 = vmatpush.msra.mxu0 0.0
          %637 = vmatpush.msra.mxu0 0.0
          %638 = vmatpush.msra.mxu0 0.0
          %639 = vmatpush.msra.mxu0 0.0
          %640 = vmatpush.msra.mxu0 0.0
          %641 = vmatpush.msra.mxu0 0.0
          %642 = vmatpush.msra.mxu0 0.0
          %643 = vmatpush.msra.mxu0 %v622
          %644 = vmatpush.msra.mxu0 %v621
          %645 = vmatmul.f32.gmra.mxu0 %v624
          %v646 = vpop.f32.mrf.mxu0
          %v647 = vadd.f32 0.0, %v646
          %648 = vmatmul.f32.gmra.mxu0 %v627
          %v649 = vpop.f32.mrf.mxu0
          %v650 = vadd.f32 0.0, %v649
          %651 = vdwg.mxu0
          %v652 = vmul.f32 %v647, 0.00031887754
          %v653 = vmul.f32 %v650, 0.00031887754
          %v654 = vld [vmem:[#allocation2] sm:$0xff]
          %v655 = vld [vmem:[#allocation2 + $0x8] sm:$0xff]
          %656 = vmatpush.msra.mxu0 0.0
          %657 = vmatpush.msra.mxu0 0.0
          %658 = vmatpush.msra.mxu0 0.0
          %659 = vmatpush.msra.mxu0 0.0
          %660 = vmatpush.msra.mxu0 0.0
          %661 = vmatpush.msra.mxu0 0.0
          %662 = vmatpush.msra.mxu0 0.0
          %663 = vmatpush.msra.mxu0 0.0
          %664 = vmatpush.msra.mxu0 0.0
          %665 = vmatpush.msra.mxu0 0.0
          %666 = vmatpush.msra.mxu0 0.0
          %667 = vmatpush.msra.mxu0 0.0
          %668 = vmatpush.msra.mxu0 0.0
          %669 = vmatpush.msra.mxu0 0.0
          %670 = vmatpush.msra.mxu0 %v655
          %671 = vmatpush.msra.mxu0 %v654
          %672 = vmatmul.f32.gmra.mxu0 %v624
          %v673 = vpop.f32.mrf.mxu0
          %v674 = vadd.f32 0.0, %v673
          %675 = vmatmul.f32.gmra.mxu0 %v627
          %v676 = vpop.f32.mrf.mxu0
          %v677 = vadd.f32 0.0, %v676
          %678 = vdwg.mxu0
          %v679 = vmul.f32 %v674, %v619
          %v680 = vmul.f32 %v677, %v620
          %v681 = vsel %vm532, %v679, 0.0
          %682 = vadd.xlane.f32.xlu0 %v681
          %v683 = vpop.xlane.xlu0 %682
          %v684 = vsel %vm532, %v680, 0.0
          %685 = vadd.xlane.f32.xlu0 %v684
          %v686 = vpop.xlane.xlu0 %685
          %v687 = vmul.f32 %v683, 0.00031887754
          %v688 = vmul.f32 %v686, 0.00031887754
          %v689 = vmul.f32 %v652, %v652
          %v690 = vmul.f32 %v653, %v653
          %v691 = vsub.f32 %v687, %v689
          %v692 = vsub.f32 %v688, %v690
          %v693 = vmax.f32 %v691, 0.0
          %v694 = vmax.f32 %v692, 0.0
          %v695 = vld [vmem:[%s6] sm:$0xff]
          %v696 = vld [vmem:[%s6 + $0x8] sm:$0xff]
          %v697 = vadd.f32 %v693, 0.001
          %v698 = vadd.f32 %v694, 0.001
          %v699 = vrsqrt.pop %v697
          %v700 = vmul.f32 %v699, %v697
          %v701 = vmul.f32 %v700, %v699
          %v702 = vmul.f32 0.5, %v701
          %v703 = vsub.f32 1.5, %v702
          %v704 = vmul.f32 %v699, %v703
          %vm705 = vweird.f32 %v697
          %vm706 = vweird.f32 %v699
          %vm707 = vmor %vm705, %vm706
          %v708 = vsel %vm707, %v699, %v704
          %v709 = vrsqrt.pop %v698
          %v710 = vmul.f32 %v709, %v698
          %v711 = vmul.f32 %v710, %v709
          %v712 = vmul.f32 0.5, %v711
          %v713 = vsub.f32 1.5, %v712
          %v714 = vmul.f32 %v709, %v713
          %vm715 = vweird.f32 %v698
          %vm716 = vweird.f32 %v709
          %vm717 = vmor %vm715, %vm716
          %v718 = vsel %vm717, %v709, %v714
          %v719 = vmul.f32 %v695, %v708
          %v720 = vmul.f32 %v696, %v718
          %v721 = vld [vmem:[%s7] sm:$0xff]
          %v722 = vld [vmem:[%s7 + $0x8] sm:$0xff]
          %v723 = vmul.f32 %v652, %v719
          %v724 = vmul.f32 %v653, %v720
          %v725 = vsub.f32 %v721, %v723
          %v726 = vsub.f32 %v722, %v724
          %v727 = vld [vmem:[%s8] sm:$0xff]
          %v728 = vld [vmem:[%s8 + $0x8] sm:$0xff]
          %v729 = vld [vmem:[%s8 + $0x10] sm:$0xff]
          %v730 = vld [vmem:[%s8 + $0x18] sm:$0xff]
          %v731 = vld [vmem:[%s8 + $0x20] sm:$0xff]
          %v732 = vld [vmem:[%s8 + $0x28] sm:$0xff]
          %v733 = vld [vmem:[%s8 + $0x30] sm:$0xff]
          %v734 = vld [vmem:[%s8 + $0x38] sm:$0xff]
          %v735 = vld [vmem:[%s8 + $0x40] sm:$0xff]
          %737 = vset.pattern.permute.xlu0 0
          %738 = vperm.xlu0 %737, %v719
          %v739 = vpop.permute.xlu0 %738
          %742 = vset.pattern.permute.xlu0 0
          %743 = vperm.xlu0 %742, %v720
          %v744 = vpop.permute.xlu0 %743
          %v746 = vmul.f32 %v739, %v619
          %v747 = vmul.f32 %v744, %v620
          %v749 = vsel %vm532, %v727, 0
          %v752 = vsel %vm532, %v728, 0
          %v755 = vsel %vm532, %v729, 0
          %v758 = vsel %vm532, %v730, 0
          %v761 = vsel %vm532, %v731, 0
          %v764 = vsel %vm532, %v732, 0
          %v767 = vsel %vm532, %v733, 0
          %v770 = vsel %vm532, %v734, 0
          %v773 = vsel %vm532, %v735, 0
          %775 = vmatpush.msra.mxu0 0.0
          %776 = vmatpush.msra.mxu0 0.0
          %777 = vmatpush.msra.mxu0 0.0
          %778 = vmatpush.msra.mxu0 0.0
          %779 = vmatpush.msra.mxu0 0.0
          %780 = vmatpush.msra.mxu0 0.0
          %781 = vmatpush.msra.mxu0 0.0
          %782 = vmatpush.msra.mxu0 0.0
          %783 = vmatpush.msra.mxu0 0.0
          %784 = vmatpush.msra.mxu0 0.0
          %785 = vmatpush.msra.mxu0 0.0
          %786 = vmatpush.msra.mxu0 0.0
          %787 = vmatpush.msra.mxu0 0.0
          %788 = vmatpush.msra.mxu0 0.0
          %789 = vmatpush.msra.mxu0 %v747
          %790 = vmatpush.msra.mxu0 %v746
          %791 = vmatmul.f32.gmra.mxu0 %v749
          %v792 = vpop.f32.mrf.mxu0
          %v793 = vadd.f32 0.0, %v792
          %794 = vmatmul.f32.gmra.mxu0 %v752
          %v795 = vpop.f32.mrf.mxu0
          %v796 = vadd.f32 0.0, %v795
          %797 = vmatmul.f32.gmra.mxu0 %v755
          %v798 = vpop.f32.mrf.mxu0
          %v799 = vadd.f32 0.0, %v798
          %800 = vmatmul.f32.gmra.mxu0 %v758
          %v801 = vpop.f32.mrf.mxu0
          %v802 = vadd.f32 0.0, %v801
          %803 = vmatmul.f32.gmra.mxu0 %v761
          %v804 = vpop.f32.mrf.mxu0
          %v805 = vadd.f32 0.0, %v804
          %806 = vmatmul.f32.gmra.mxu0 %v764
          %v807 = vpop.f32.mrf.mxu0
          %v808 = vadd.f32 0.0, %v807
          %809 = vmatmul.f32.gmra.mxu0 %v767
          %v810 = vpop.f32.mrf.mxu0
          %v811 = vadd.f32 0.0, %v810
          %812 = vmatmul.f32.gmra.mxu0 %v770
          %v813 = vpop.f32.mrf.mxu0
          %v814 = vadd.f32 0.0, %v813
          %815 = vmatmul.f32.gmra.mxu0 %v773
          %v816 = vpop.f32.mrf.mxu0
          %v817 = vadd.f32 0.0, %v816
          %818 = vdwg.mxu0
          %819 = vst.msk [vmem:[%s10] sm:$0xff] %vm532, %v793
          %820 = vst.msk [vmem:[%s10 + $0x8] sm:$0xff] %vm532, %v796
          %821 = vst.msk [vmem:[%s10 + $0x10] sm:$0xff] %vm532, %v799
          %822 = vst.msk [vmem:[%s10 + $0x18] sm:$0xff] %vm532, %v802
          %823 = vst.msk [vmem:[%s10 + $0x20] sm:$0xff] %vm532, %v805
          %824 = vst.msk [vmem:[%s10 + $0x28] sm:$0xff] %vm532, %v808
          %825 = vst.msk [vmem:[%s10 + $0x30] sm:$0xff] %vm532, %v811
          %826 = vst.msk [vmem:[%s10 + $0x38] sm:$0xff] %vm532, %v814
          %827 = vst.msk [vmem:[%s10 + $0x40] sm:$0xff] %vm532, %v817
          %v828 = vld [vmem:[%s8] sm:$0xff]
          %v829 = vld [vmem:[%s8 + $0x8] sm:$0xff]
          %v830 = vld [vmem:[%s8 + $0x10] sm:$0xff]
          %v831 = vld [vmem:[%s8 + $0x18] sm:$0xff]
          %v832 = vld [vmem:[%s8 + $0x20] sm:$0xff]
          %v833 = vld [vmem:[%s8 + $0x28] sm:$0xff]
          %v834 = vld [vmem:[%s8 + $0x30] sm:$0xff]
          %v835 = vld [vmem:[%s8 + $0x38] sm:$0xff]
          %v836 = vld [vmem:[%s8 + $0x40] sm:$0xff]
          %v838 = vsel %vm532, %v828, 0
          %v841 = vsel %vm532, %v829, 0
          %v844 = vsel %vm532, %v830, 0
          %v847 = vsel %vm532, %v831, 0
          %v850 = vsel %vm532, %v832, 0
          %v853 = vsel %vm532, %v833, 0
          %v856 = vsel %vm532, %v834, 0
          %v859 = vsel %vm532, %v835, 0
          %v862 = vsel %vm532, %v836, 0
          %864 = vmatpush.msra.mxu0 0.0
          %865 = vmatpush.msra.mxu0 0.0
          %866 = vmatpush.msra.mxu0 0.0
          %867 = vmatpush.msra.mxu0 0.0
          %868 = vmatpush.msra.mxu0 0.0
          %869 = vmatpush.msra.mxu0 0.0
          %870 = vmatpush.msra.mxu0 0.0
          %871 = vmatpush.msra.mxu0 0.0
          %872 = vmatpush.msra.mxu0 0.0
          %873 = vmatpush.msra.mxu0 0.0
          %874 = vmatpush.msra.mxu0 0.0
          %875 = vmatpush.msra.mxu0 0.0
          %876 = vmatpush.msra.mxu0 0.0
          %877 = vmatpush.msra.mxu0 0.0
          %878 = vmatpush.msra.mxu0 %v726
          %879 = vmatpush.msra.mxu0 %v725
          %880 = vmatmul.f32.gmra.mxu0 %v838
          %v881 = vpop.f32.mrf.mxu0
          %v882 = vadd.f32 0.0, %v881
          %883 = vmatmul.f32.gmra.mxu0 %v841
          %v884 = vpop.f32.mrf.mxu0
          %v885 = vadd.f32 0.0, %v884
          %886 = vmatmul.f32.gmra.mxu0 %v844
          %v887 = vpop.f32.mrf.mxu0
          %v888 = vadd.f32 0.0, %v887
          %889 = vmatmul.f32.gmra.mxu0 %v847
          %v890 = vpop.f32.mrf.mxu0
          %v891 = vadd.f32 0.0, %v890
          %892 = vmatmul.f32.gmra.mxu0 %v850
          %v893 = vpop.f32.mrf.mxu0
          %v894 = vadd.f32 0.0, %v893
          %895 = vmatmul.f32.gmra.mxu0 %v853
          %v896 = vpop.f32.mrf.mxu0
          %v897 = vadd.f32 0.0, %v896
          %898 = vmatmul.f32.gmra.mxu0 %v856
          %v899 = vpop.f32.mrf.mxu0
          %v900 = vadd.f32 0.0, %v899
          %901 = vmatmul.f32.gmra.mxu0 %v859
          %v902 = vpop.f32.mrf.mxu0
          %v903 = vadd.f32 0.0, %v902
          %904 = vmatmul.f32.gmra.mxu0 %v862
          %v905 = vpop.f32.mrf.mxu0
          %v906 = vadd.f32 0.0, %v905
          %907 = vdwg.mxu0
          %908 = vst.msk [vmem:[%s11] sm:$0xff] %vm551, %v882
          %909 = vst.msk [vmem:[%s11 + $0x8] sm:$0xff] %vm551, %v885
          %910 = vst.msk [vmem:[%s11 + $0x10] sm:$0xff] %vm551, %v888
          %911 = vst.msk [vmem:[%s11 + $0x18] sm:$0xff] %vm551, %v891
          %912 = vst.msk [vmem:[%s11 + $0x20] sm:$0xff] %vm551, %v894
          %913 = vst.msk [vmem:[%s11 + $0x28] sm:$0xff] %vm551, %v897
          %914 = vst.msk [vmem:[%s11 + $0x30] sm:$0xff] %vm551, %v900
          %915 = vst.msk [vmem:[%s11 + $0x38] sm:$0xff] %vm551, %v903
          %916 = vst.msk [vmem:[%s11 + $0x40] sm:$0xff] %vm551, %v906
        $region72: #{tpu_custom_call.1} parent=59 // pred_fallthru
          _
        // Predicated region
        $region73: #{tpu_custom_call.1} parent=59 // pred_check
          %p917 = pneg %p254
        $region74: #{tpu_custom_call.1} parent=59 // pred_check_branch
          %919 = sbr.rel (%p917) target = $region76
        $region75: #{tpu_custom_call.1} parent=59 // pred_region
          _
        $region76: #{tpu_custom_call.1} parent=59 // pred_fallthru
          _
        // Predicated region
        $region77: #{tpu_custom_call.1} parent=59 // pred_check
          %p920 = pneg %p275
        $region78: #{tpu_custom_call.1} parent=59 // pred_check_branch
          %922 = sbr.rel (%p920) target = $region80
        $region79: #{tpu_custom_call.1} parent=59 // pred_region
          _
        $region80: #{tpu_custom_call.1} parent=59 // pred_fallthru
          _
        // Predicated region
        $region81: #{tpu_custom_call.1} parent=59 // pred_check
          %p923 = pneg %p254
        $region82: #{tpu_custom_call.1} parent=59 // pred_check_branch
          %925 = sbr.rel (%p923) target = $region84
        $region83: #{tpu_custom_call.1} parent=59 // pred_region
          _
        $region84: #{tpu_custom_call.1} parent=59 // pred_fallthru
          _
        // Predicated region
        $region85: #{tpu_custom_call.1} parent=59 // pred_check
          %p926 = pneg %p275
        $region86: #{tpu_custom_call.1} parent=59 // pred_check_branch
          %928 = sbr.rel (%p926) target = $region88
        $region87: #{tpu_custom_call.1} parent=59 // pred_region
          _
        $region88: #{tpu_custom_call.1} parent=59 // pred_fallthru
          _
      $region60: #{tpu_custom_call.1} parent=5 // pred_fallthru
        _
      %p929 = scmp.le.s32.totalorder 2, %s21
      // Predicated region
      $region89: #{tpu_custom_call.1} parent=5 // pred_check
        %p930 = pneg %p929
      $region90: #{tpu_custom_call.1} parent=5 // pred_check_branch
        %932 = sbr.rel (%p930) target = $region92
      $region91: #{tpu_custom_call.1} parent=5 // pred_region
        %s933 = ssub.s32 %s21, 2
      $region92: #{tpu_custom_call.1} parent=5 // pred_fallthru
        _
    $region6: #{tpu_custom_call.1} parent=1 // loop_footer
      %s25 = sadd.s32 1, %s21
    $region7: #{tpu_custom_call.1} parent=1 // loop_footer_branch
      %20 = sbr.rel target = $region3
    $region8: #{tpu_custom_call.1} parent=1 // loop_exit
      _
    %934 = vsyncpa [#allocation5], 1
    %s935 = scalar_lea.sflag [#allocation5], 1
    %936 = vsyncpa %s935, 1

</llo_original>
